<compile_context>
chip_gen: v5e
topology: v5e:2x2
jax: 0.10.0
libtpu: 0.0.40
codegen_flags: <defaults>
</compile_context>

<pallas_src>
import jax
import jax.numpy as jnp
from jax.experimental import pallas as pl
from jax.experimental.pallas import tpu as pltpu

HID_SIZE = 200      # hidden width of the reference PyTorch module
_LANE = 128
_SUBLANE = 8


def _round_up(x, m):
    return (x + m - 1) // m * m


def critic_kernel(x_ref, w1_ref, b1_ref, w2_ref, b2_ref, o_ref):
    # ---- layer 1: MXU matmul (f32 accumulate) + VPU bias-add / ReLU --------
    h = jnp.dot(x_ref[...], w1_ref[...], preferred_element_type=jnp.float32)
    h = jnp.maximum(h + b1_ref[...], 0.0)                        # (TB, HP) f32

    # ---- layer 2: standard (TB, HP) @ (HP, 1) contraction -------------------
    # No transpose of h; the masked (TB, 1) store is only 4*TB bytes per tile.
    v = jnp.dot(h, w2_ref[...], preferred_element_type=jnp.float32)  # (TB, 1)
    o_ref[...] = (v + b2_ref[0]).astype(o_ref.dtype)             # scalar bias (SMEM)


def prepare_critic_params(w1, b1, w2, b2):
    """Pad/reshape parameters once (hoisted out of the per-call path).

    w1 : (obs_dim, HID)  b1 : (HID,)  w2 : (HID, 1)  b2 : (1,)
    Hidden dim is zero-padded 200 -> 256 so h / W1 / b1 live in clean,
    unmasked (8, 128) vreg tiles; padded units contribute exactly 0 because
    ReLU(0*x + 0) = 0 and their W2 entries are 0.
    """
    D, H = w1.shape
    HP = _round_up(H, _LANE)
    w1p = jnp.pad(w1, ((0, 0), (0, HP - H)))                       # (D, HP)
    b1p = jnp.pad(b1, (0, HP - H)).reshape(1, HP)                  # (1, HP)
    w2p = jnp.pad(w2.reshape(H, 1), ((0, HP - H), (0, 0)))         # (HP, 1)
    b2s = b2.reshape(1).astype(jnp.float32)                        # SMEM scalar
    return w1p, b1p, w2p, b2s


def critic_forward(x, params, *, block_b=4096):
    """Critic forward pass.  x: (B, obs_dim).  Returns (B, 1) f32."""
    w1p, b1p, w2p, b2s = params
    B, D = x.shape
    HP = w1p.shape[1]

    # Batch tile: large enough to amortize the ~0.35 us/step fixed cost, but
    # capped at ceil(B/2) so big batches give >=2 grid steps (v7x: both TCs
    # get their own DMA stream).  TB is a multiple of 8 (sublane alignment).
    half = -(-B // 2)                                    # ceil(B / 2)
    TB = max(_SUBLANE, min(block_b, _round_up(half, _SUBLANE)))
    G = pl.cdiv(B, TB)          # ragged last block handled by Pallas (no pad)

    return pl.pallas_call(
        critic_kernel,
        out_shape=jax.ShapeDtypeStruct((B, 1), jnp.float32),
        grid=(G,),
        in_specs=[
            pl.BlockSpec((TB, D), lambda i: (i, 0)),            # x tile (pipelined)
            pl.BlockSpec((D, HP), lambda i: (0, 0)),            # W1 (VMEM-resident)
            pl.BlockSpec((1, HP), lambda i: (0, 0)),            # b1 (VMEM-resident)
            pl.BlockSpec((HP, 1), lambda i: (0, 0)),            # W2 column (VMEM-resident)
            pl.BlockSpec(memory_space=pltpu.MemorySpace.SMEM),  # b2 scalar
        ],
        out_specs=pl.BlockSpec((TB, 1), lambda i: (i, 0)),
        compiler_params=pltpu.CompilerParams(
            dimension_semantics=("parallel",),   # v7x: both TCs split the batch
        ),
    )(x, w1p, b1p, w2p, b2s)


def init_critic_params(key, obs_dim, hid=HID_SIZE):
    """torch.nn.Linear default init: U[-1/sqrt(fan_in), 1/sqrt(fan_in)]."""
    k1, k2, k3, k4 = jax.random.split(key, 4)
    bound1 = 1.0 / jnp.sqrt(obs_dim)
    bound2 = 1.0 / jnp.sqrt(hid)
    w1 = jax.random.uniform(k1, (obs_dim, hid), jnp.float32, -bound1, bound1)
    b1 = jax.random.uniform(k2, (hid,), jnp.float32, -bound1, bound1)
    w2 = jax.random.uniform(k3, (hid, 1), jnp.float32, -bound2, bound2)
    b2 = jax.random.uniform(k4, (1,), jnp.float32, -bound2, bound2)
    return w1, b1, w2, b2


if __name__ == "__main__":
    key = jax.random.PRNGKey(0)
    k_params, k_x, k_x2 = jax.random.split(key, 3)

    batch, obs_dim = 8, 32
    w1, b1, w2, b2 = init_critic_params(k_params, obs_dim)
    params = prepare_critic_params(w1, b1, w2, b2)      # padded once, reused

    def ref_fn(xx):
        return jnp.maximum(xx @ w1 + b1, 0.0) @ w2 + b2

    # --- primary check: exact-tile path -------------------------------------
    x = jax.random.normal(k_x, (batch, obs_dim), dtype=jnp.float32)
    out = jax.block_until_ready(critic_forward(x, params))
    assert out.shape == (batch, 1), out.shape
    assert jnp.allclose(out, ref_fn(x), atol=1e-4, rtol=1e-4), \
        float(jnp.max(jnp.abs(out - ref_fn(x))))

    # --- ragged-batch check: partial last block (no jnp.pad of x) -----------
    x2 = jax.random.normal(k_x2, (13, obs_dim), dtype=jnp.float32)
    out2 = jax.block_until_ready(critic_forward(x2, params))
    assert out2.shape == (13, 1), out2.shape
    assert jnp.allclose(out2, ref_fn(x2), atol=1e-4, rtol=1e-4), \
        float(jnp.max(jnp.abs(out2 - ref_fn(x2))))

    print("KERNEL_OK")
</pallas_src>

<mosaic_0001>
module attributes {stable_mosaic.version = 11 : i64} {
  func.func @critic_kernel(%arg0: i32, %arg1: memref<8x32xf32, #tpu.memory_space<vmem>>, %arg2: memref<32x256xf32, #tpu.memory_space<vmem>>, %arg3: memref<1x256xf32, #tpu.memory_space<vmem>>, %arg4: memref<256x1xf32, #tpu.memory_space<vmem>>, %arg5: memref<1xf32, #tpu.memory_space<smem>>, %arg6: memref<8x1xf32, #tpu.memory_space<vmem>>) attributes {dimension_semantics = [#tpu.dimension_semantics<parallel>], iteration_bounds = array<i64: 1>, scalar_prefetch = 0 : i64, scratch_operands = 0 : i64, tpu.core_type = #tpu.core_type<tc>, window_params = [{transform_indices = @transform_0, window_bounds = array<i64: 8, 32>}, {pipeline_mode = #tpu.pipeline_mode<synchronous>, transform_indices = @transform_1, window_bounds = array<i64: 32, 256>}, {pipeline_mode = #tpu.pipeline_mode<synchronous>, transform_indices = @transform_2, window_bounds = array<i64: 1, 256>}, {pipeline_mode = #tpu.pipeline_mode<synchronous>, transform_indices = @transform_3, window_bounds = array<i64: 256, 1>}, {transform_indices = @transform_4, window_bounds = array<i64: 1>}, {transform_indices = @transform_5, window_bounds = array<i64: 8, 1>}]} {
    %c0 = arith.constant 0 : index
    %c0_0 = arith.constant 0 : index
    %0 = vector.load %arg1[%c0, %c0_0] : memref<8x32xf32, #tpu.memory_space<vmem>>, vector<8x32xf32>
    %c0_1 = arith.constant 0 : index
    %c0_2 = arith.constant 0 : index
    %1 = vector.load %arg2[%c0_1, %c0_2] : memref<32x256xf32, #tpu.memory_space<vmem>>, vector<32x256xf32>
    %cst = arith.constant dense<0.000000e+00> : vector<8x256xf32>
    %2 = tpu.matmul %0, %1, %cst {dimension_numbers = #tpu.dot_dimension_numbers<[1], [0], [0], [1], [0, 0, 1, 1], [], []>} : vector<8x32xf32>, vector<32x256xf32>, vector<8x256xf32> -> vector<8x256xf32>
    %c0_3 = arith.constant 0 : index
    %c0_4 = arith.constant 0 : index
    %3 = vector.load %arg3[%c0_3, %c0_4] : memref<1x256xf32, #tpu.memory_space<vmem>>, vector<1x256xf32>
    %4 = vector.broadcast %3 : vector<1x256xf32> to vector<8x256xf32>
    %5 = arith.addf %2, %4 : vector<8x256xf32>
    %cst_5 = arith.constant 0.000000e+00 : f32
    %6 = vector.broadcast %cst_5 : f32 to vector<8x256xf32>
    %7 = arith.maximumf %5, %6 : vector<8x256xf32>
    %c0_6 = arith.constant 0 : index
    %c0_7 = arith.constant 0 : index
    %8 = vector.load %arg4[%c0_6, %c0_7] : memref<256x1xf32, #tpu.memory_space<vmem>>, vector<256x1xf32>
    %cst_8 = arith.constant dense<0.000000e+00> : vector<8x1xf32>
    %9 = tpu.matmul %7, %8, %cst_8 {dimension_numbers = #tpu.dot_dimension_numbers<[1], [0], [0], [1], [0, 0, 1, 1], [], []>} : vector<8x256xf32>, vector<256x1xf32>, vector<8x1xf32> -> vector<8x1xf32>
    %c0_9 = arith.constant 0 : index
    %10 = memref.load %arg5[%c0_9] : memref<1xf32, #tpu.memory_space<smem>>
    %11 = vector.broadcast %10 : f32 to vector<8x1xf32>
    %12 = arith.addf %9, %11 : vector<8x1xf32>
    %c0_10 = arith.constant 0 : index
    %c0_11 = arith.constant 0 : index
    %13 = vector.load %arg6[%c0_10, %c0_11] : memref<8x1xf32, #tpu.memory_space<vmem>>, vector<8x1xf32>
    tpu.vector_store %arg6[%c0_10, %c0_11], %12 {strides = array<i32>} : memref<8x1xf32, #tpu.memory_space<vmem>>, vector<8x1xf32>,
    return
  }
  func.func @transform_0(%arg0: i32) -> (i32, i32) {
    %c0_i32 = arith.constant 0 : i32
    %c0_i32_0 = arith.constant 0 : i32
    return %arg0, %c0_i32 : i32, i32
  }
  func.func @transform_1(%arg0: i32) -> (i32, i32) {
    %c0_i32 = arith.constant 0 : i32
    %c0_i32_0 = arith.constant 0 : i32
    %c0_i32_1 = arith.constant 0 : i32
    return %c0_i32, %c0_i32_0 : i32, i32
  }
  func.func @transform_2(%arg0: i32) -> (i32, i32) {
    %c0_i32 = arith.constant 0 : i32
    %c0_i32_0 = arith.constant 0 : i32
    %c0_i32_1 = arith.constant 0 : i32
    return %c0_i32, %c0_i32_0 : i32, i32
  }
  func.func @transform_3(%arg0: i32) -> (i32, i32) {
    %c0_i32 = arith.constant 0 : i32
    %c0_i32_0 = arith.constant 0 : i32
    %c0_i32_1 = arith.constant 0 : i32
    return %c0_i32, %c0_i32_0 : i32, i32
  }
  func.func @transform_4(%arg0: i32) -> i32 {
    %c0_i32 = arith.constant 0 : i32
    %c0_i32_0 = arith.constant 0 : i32
    return %c0_i32 : i32
  }
  func.func @transform_5(%arg0: i32) -> (i32, i32) {
    %c0_i32 = arith.constant 0 : i32
    %c0_i32_0 = arith.constant 0 : i32
    return %arg0, %c0_i32 : i32, i32
  }
}

</mosaic_0001>

<llo_original>
// kernel: tpu_custom_call.1
$region0: #{tpu_custom_call.1}
  #allocation0 [shape = 'u32[]', space=smem, size = 0x4, offset = 0x4, fixed_abs, tag = 'smem constant byte address 0x4 - core index']
  #allocation1 [shape = 'u32[72,128]{1,0:T(1,128)}', space=vmem, size = 0x9000, scoped, tag = 'internal scratch']
  #allocation2 [shape = 'f32[1]{0:T(128)S(6)}', space=smem, size = 0x200, scoped, tag = 'scoped memory for tpu_custom_call.1']
  %s0 = inlined_call_operand.vmem [shape: f32[8,32], index: 0, kind: input, shape index: {}]
  %s1 = inlined_call_operand.vmem [shape: f32[32,256], index: 1, kind: input, shape index: {}]
  %s2 = inlined_call_operand.vmem [shape: f32[1,256], index: 2, kind: input, shape index: {}]
  %s3 = inlined_call_operand.vmem [shape: f32[256,1], index: 3, kind: input, shape index: {}]
  %s4 = inlined_call_operand.<no memory space> [shape: f32[1], index: 4, kind: input, shape index: {}]
  %s5 = inlined_call_operand.vmem [shape: f32[8,1], index: 5, kind: output, shape index: {}]
  %s6 = sld [smem:[#allocation0]]
  $region30: #{tpu_custom_call.1} parent=0
    _
  %s8 = ssub.s32 1, %s6
  %s9 = scalar_select 0, %s8, %s6
  %10 = sst [smem:[#allocation2]] %s4
  // Predicated region
  $region2: #{tpu_custom_call.1} parent=0 // pred_check
    _
  $region3: #{tpu_custom_call.1} parent=0 // pred_check_branch
    %12 = sbr.rel (0) target = $region5
  $region4: #{tpu_custom_call.1} parent=0 // pred_region
    _
  $region5: #{tpu_custom_call.1} parent=0 // pred_fallthru
    _
  // Predicated region
  $region6: #{tpu_custom_call.1} parent=0 // pred_check
    _
  $region7: #{tpu_custom_call.1} parent=0 // pred_check_branch
    %14 = sbr.rel (0) target = $region9
  $region8: #{tpu_custom_call.1} parent=0 // pred_region
    _
  $region9: #{tpu_custom_call.1} parent=0 // pred_fallthru
    _
  // Predicated region
  $region10: #{tpu_custom_call.1} parent=0 // pred_check
    _
  $region11: #{tpu_custom_call.1} parent=0 // pred_check_branch
    %16 = sbr.rel (0) target = $region13
  $region12: #{tpu_custom_call.1} parent=0 // pred_region
    _
  $region13: #{tpu_custom_call.1} parent=0 // pred_fallthru
    _
  // Predicated region
  $region14: #{tpu_custom_call.1} parent=0 // pred_check
    _
  $region15: #{tpu_custom_call.1} parent=0 // pred_check_branch
    %18 = sbr.rel (0) target = $region17
  $region16: #{tpu_custom_call.1} parent=0 // pred_region
    _
  $region17: #{tpu_custom_call.1} parent=0 // pred_fallthru
    _
  // Predicated region
  $region18: #{tpu_custom_call.1} parent=0 // pred_check
    _
  $region19: #{tpu_custom_call.1} parent=0 // pred_check_branch
    %20 = sbr.rel (0) target = $region21
  $region20: #{tpu_custom_call.1} parent=0 // pred_region
    _
  $region21: #{tpu_custom_call.1} parent=0 // pred_fallthru
    _
  %v21 = vld [vmem:[%s0] sm:$0xff]
  %v22 = vld [vmem:[%s1] sm:$0xff]
  %v23 = vld [vmem:[%s1 + $0x8] sm:$0xff]
  %v24 = vld [vmem:[%s1 + $0x10] sm:$0xff]
  %v25 = vld [vmem:[%s1 + $0x18] sm:$0xff]
  %v26 = vld [vmem:[%s1 + $0x20] sm:$0xff]
  %v27 = vld [vmem:[%s1 + $0x28] sm:$0xff]
  %v28 = vld [vmem:[%s1 + $0x30] sm:$0xff]
  %v29 = vld [vmem:[%s1 + $0x38] sm:$0xff]
  %v30 = vld [vmem:[%s2] sm:$0x3]
  %v32 = vperm.slane %v30, 0
  %v33 = vperm.slane %v30, 1
  %vm36 = vcmask 261120
  %v38 = vsel %vm36, %v21, 0
  %40 = vmatpush.msra.mxu0 0.0
  %41 = vmatpush.msra.mxu0 0.0
  %42 = vmatpush.msra.mxu0 0.0
  %43 = vmatpush.msra.mxu0 0.0
  %44 = vmatpush.msra.mxu0 0.0
  %45 = vmatpush.msra.mxu0 0.0
  %46 = vmatpush.msra.mxu0 0.0
  %47 = vmatpush.msra.mxu0 0.0
  %48 = vmatpush.msra.mxu0 0.0
  %49 = vmatpush.msra.mxu0 0.0
  %50 = vmatpush.msra.mxu0 0.0
  %51 = vmatpush.msra.mxu0 0.0
  %52 = vmatpush.msra.mxu0 %v28
  %53 = vmatpush.msra.mxu0 %v26
  %54 = vmatpush.msra.mxu0 %v24
  %55 = vmatpush.msra.mxu0 %v22
  %56 = vmatmul.f32.gmra.mxu0 %v38
  %v57 = vpop.f32.mrf.mxu0
  %v58 = vadd.f32 %v32, %v57
  %59 = vdwg.mxu0
  %60 = vmatpush.msra.mxu0 0.0
  %61 = vmatpush.msra.mxu0 0.0
  %62 = vmatpush.msra.mxu0 0.0
  %63 = vmatpush.msra.mxu0 0.0
  %64 = vmatpush.msra.mxu0 0.0
  %65 = vmatpush.msra.mxu0 0.0
  %66 = vmatpush.msra.mxu0 0.0
  %67 = vmatpush.msra.mxu0 0.0
  %68 = vmatpush.msra.mxu0 0.0
  %69 = vmatpush.msra.mxu0 0.0
  %70 = vmatpush.msra.mxu0 0.0
  %71 = vmatpush.msra.mxu0 0.0
  %72 = vmatpush.msra.mxu0 %v29
  %73 = vmatpush.msra.mxu0 %v27
  %74 = vmatpush.msra.mxu0 %v25
  %75 = vmatpush.msra.mxu0 %v23
  %76 = vmatmul.f32.gmra.mxu0 %v38
  %v77 = vpop.f32.mrf.mxu0
  %v78 = vadd.f32 %v33, %v77
  %79 = vdwg.mxu0
  %v80 = vmax.f32 %v58, 0.0
  %v81 = vmax.f32 %v78, 0.0
  %v82 = vld [vmem:[%s3] sm:$0xff]
  %v83 = vld [vmem:[%s3 + $0x8] sm:$0xff]
  %v84 = vld [vmem:[%s3 + $0x10] sm:$0xff]
  %v85 = vld [vmem:[%s3 + $0x18] sm:$0xff]
  %v86 = vld [vmem:[%s3 + $0x20] sm:$0xff]
  %v87 = vld [vmem:[%s3 + $0x28] sm:$0xff]
  %v88 = vld [vmem:[%s3 + $0x30] sm:$0xff]
  %v89 = vld [vmem:[%s3 + $0x38] sm:$0xff]
  %v90 = vld [vmem:[%s3 + $0x40] sm:$0xff]
  %v91 = vld [vmem:[%s3 + $0x48] sm:$0xff]
  %v92 = vld [vmem:[%s3 + $0x50] sm:$0xff]
  %v93 = vld [vmem:[%s3 + $0x58] sm:$0xff]
  %v94 = vld [vmem:[%s3 + $0x60] sm:$0xff]
  %v95 = vld [vmem:[%s3 + $0x68] sm:$0xff]
  %v96 = vld [vmem:[%s3 + $0x70] sm:$0xff]
  %v97 = vld [vmem:[%s3 + $0x78] sm:$0xff]
  %v98 = vld [vmem:[%s3 + $0x80] sm:$0xff]
  %v99 = vld [vmem:[%s3 + $0x88] sm:$0xff]
  %v100 = vld [vmem:[%s3 + $0x90] sm:$0xff]
  %v101 = vld [vmem:[%s3 + $0x98] sm:$0xff]
  %v102 = vld [vmem:[%s3 + $0xa0] sm:$0xff]
  %v103 = vld [vmem:[%s3 + $0xa8] sm:$0xff]
  %v104 = vld [vmem:[%s3 + $0xb0] sm:$0xff]
  %v105 = vld [vmem:[%s3 + $0xb8] sm:$0xff]
  %v106 = vld [vmem:[%s3 + $0xc0] sm:$0xff]
  %v107 = vld [vmem:[%s3 + $0xc8] sm:$0xff]
  %v108 = vld [vmem:[%s3 + $0xd0] sm:$0xff]
  %v109 = vld [vmem:[%s3 + $0xd8] sm:$0xff]
  %v110 = vld [vmem:[%s3 + $0xe0] sm:$0xff]
  %v111 = vld [vmem:[%s3 + $0xe8] sm:$0xff]
  %v112 = vld [vmem:[%s3 + $0xf0] sm:$0xff]
  %v113 = vld [vmem:[%s3 + $0xf8] sm:$0xff]
  %s114 = sld [smem:[#allocation2]]
  %v115 = vstv %s114
  %116 = vmatpush.msra.mxu0 %v97
  %117 = vmatpush.msra.mxu0 %v96
  %118 = vmatpush.msra.mxu0 %v95
  %119 = vmatpush.msra.mxu0 %v94
  %120 = vmatpush.msra.mxu0 %v93
  %121 = vmatpush.msra.mxu0 %v92
  %122 = vmatpush.msra.mxu0 %v91
  %123 = vmatpush.msra.mxu0 %v90
  %124 = vmatpush.msra.mxu0 %v89
  %125 = vmatpush.msra.mxu0 %v88
  %126 = vmatpush.msra.mxu0 %v87
  %127 = vmatpush.msra.mxu0 %v86
  %128 = vmatpush.msra.mxu0 %v85
  %129 = vmatpush.msra.mxu0 %v84
  %130 = vmatpush.msra.mxu0 %v83
  %131 = vmatpush.msra.mxu0 %v82
  %132 = vmatmul.f32.gmra.mxu0 %v80
  %v133 = vpop.f32.mrf.mxu0
  %v134 = vadd.f32 %v115, %v133
  %135 = vdwg.mxu0
  %136 = vmatpush.msra.mxu0 %v113
  %137 = vmatpush.msra.mxu0 %v112
  %138 = vmatpush.msra.mxu0 %v111
  %139 = vmatpush.msra.mxu0 %v110
  %140 = vmatpush.msra.mxu0 %v109
  %141 = vmatpush.msra.mxu0 %v108
  %142 = vmatpush.msra.mxu0 %v107
  %143 = vmatpush.msra.mxu0 %v106
  %144 = vmatpush.msra.mxu0 %v105
  %145 = vmatpush.msra.mxu0 %v104
  %146 = vmatpush.msra.mxu0 %v103
  %147 = vmatpush.msra.mxu0 %v102
  %148 = vmatpush.msra.mxu0 %v101
  %149 = vmatpush.msra.mxu0 %v100
  %150 = vmatpush.msra.mxu0 %v99
  %151 = vmatpush.msra.mxu0 %v98
  %152 = vmatmul.f32.gmra.mxu0 %v81
  %v153 = vpop.f32.mrf.mxu0
  %v154 = vadd.f32 %v134, %v153
  %155 = vdwg.mxu0
  %vm156 = vcmask 7168
  %157 = vst.msk [vmem:[%s5] sm:$0xff] %vm156, %v154
  // Predicated region
  $region22: #{tpu_custom_call.1} parent=0 // pred_check
    _
  $region23: #{tpu_custom_call.1} parent=0 // pred_check_branch
    %159 = sbr.rel (0) target = $region25
  $region24: #{tpu_custom_call.1} parent=0 // pred_region
    _
  $region25: #{tpu_custom_call.1} parent=0 // pred_fallthru
    _
  // Predicated region
  $region26: #{tpu_custom_call.1} parent=0 // pred_check
    _
  $region27: #{tpu_custom_call.1} parent=0 // pred_check_branch
    %161 = sbr.rel (0) target = $region29
  $region28: #{tpu_custom_call.1} parent=0 // pred_region
    _
  $region29: #{tpu_custom_call.1} parent=0 // pred_fallthru
    _

</llo_original>
